<compile_context>
chip_gen: v5e
topology: v5e:2x2
jax: 0.10.0
libtpu: 0.0.40
codegen_flags: <defaults>
</compile_context>

<pallas_src>
import jax
import jax.numpy as jnp
from jax.experimental import pallas as pl
from jax.experimental.pallas import tpu as pltpu

_SOFTPLUS_THRESHOLD = 20.0  # torch F.softplus default threshold


def _mish_math(x):
    """mish(x) = x * tanh(softplus(x)), torch-matching threshold at 20."""
    xf = x.astype(jnp.float32)
    # Single transcendental: tanh(softplus(x)) = u / (u + 2), u = e^x (e^x + 2).
    # Clamp the exp argument so the branch not taken by the where below can
    # never produce inf (inf/inf -> NaN would poison the select).
    t = jnp.exp(jnp.minimum(xf, _SOFTPLUS_THRESHOLD))
    u = t * (t + 2.0)
    y = xf * (u / (u + 2.0))
    # torch: for x > 20, softplus(x) = x and tanh(x) ~ 1, so mish(x) = x.
    return jnp.where(xf > _SOFTPLUS_THRESHOLD, xf, y)


def _mish_kernel(x_ref, o_ref):
    o_ref[...] = _mish_math(x_ref[...]).astype(o_ref.dtype)


def _mish_2d(x2d, *, block_bytes=4 * 1024 * 1024):
    """Run the Mish kernel over a lane-dense (rows, lanes) slab."""
    rows, lanes = x2d.shape

    # Byte-budgeted row tile (~block_bytes per buffer), sublane-aligned (8).
    bytes_per_row = lanes * jnp.dtype(x2d.dtype).itemsize
    budget_rows = max(8, (block_bytes // bytes_per_row) // 8 * 8)

    if rows > 8:
        # Force an even step count >= 2 so v7x's two TensorCores get balanced
        # work; v5e/v6e (1 TC) are unaffected.
        steps = pl.cdiv(rows, budget_rows)
        if steps < 2:
            steps = 2
        elif steps % 2:
            steps += 1
        block_rows = min(rows, ((pl.cdiv(rows, steps) + 7) // 8) * 8)
    else:
        block_rows = rows  # full second-to-last dim (allowed by tiling rules)

    grid = (pl.cdiv(rows, block_rows),)

    return pl.pallas_call(
        _mish_kernel,
        out_shape=jax.ShapeDtypeStruct((rows, lanes), x2d.dtype),
        grid_spec=pltpu.PrefetchScalarGridSpec(
            num_scalar_prefetch=0,
            grid=grid,
            in_specs=[pl.BlockSpec((block_rows, lanes), lambda i: (i, 0))],
            out_specs=pl.BlockSpec((block_rows, lanes), lambda i: (i, 0)),
        ),
        compiler_params=pltpu.CompilerParams(
            dimension_semantics=("parallel",),      # shards grid across TCs (v7x)
            vmem_limit_bytes=32 * 1024 * 1024,      # explicit for v5e; safe on v7x
        ),
    )(x2d)


def mish(x, *, block_bytes=4 * 1024 * 1024):
    """Mish for an arbitrary-shape (e.g. NCHW) tensor via a Pallas TPU kernel."""
    orig_shape = x.shape
    total = x.size
    if total == 0:
        return x

    # Pick the largest lane width (multiple of 128) that exactly divides the
    # flattened size -> no pad, no slice; reshape is a free bitcast.
    lanes = 0
    for cand in (4096, 2048, 1024, 512, 256, 128):
        if total % cand == 0:
            lanes = cand
            break

    if lanes:
        out2d = _mish_2d(x.reshape(total // lanes, lanes), block_bytes=block_bytes)
        return out2d.reshape(orig_shape)

    # Fallback for sizes not divisible by 128: kernel on the bulk, plain jnp
    # on the tiny (<128 element) tail.  No full-tensor pad or slice.
    flat = x.reshape(-1)
    bulk = (total // 128) * 128
    if bulk == 0:
        # Tensor smaller than one lane row: not worth a kernel launch.
        return _mish_math(flat).astype(x.dtype).reshape(orig_shape)
    head = _mish_2d(flat[:bulk].reshape(bulk // 128, 128), block_bytes=block_bytes)
    tail = _mish_math(flat[bulk:]).astype(x.dtype)
    return jnp.concatenate([head.reshape(-1), tail]).reshape(orig_shape)


def mish_reference(x):
    # Exact reference matching torch: x * tanh(softplus(x)), threshold=20.
    xf = x.astype(jnp.float32)
    sp = jnp.where(xf > _SOFTPLUS_THRESHOLD, xf,
                   jnp.log1p(jnp.exp(jnp.minimum(xf, _SOFTPLUS_THRESHOLD))))
    return (xf * jnp.tanh(sp)).astype(x.dtype)


if __name__ == "__main__":
    key = jax.random.PRNGKey(0)

    # Main test: NCHW-like shape, divisible path (no pad / no slice).
    x = jax.random.normal(key, (2, 4, 16, 16), dtype=jnp.float32) * 3.0
    # Exercise the softplus-threshold guard and the underflow path.
    x = x.at[0, 0, 0, 0].set(25.0)
    x = x.at[0, 0, 0, 1].set(-30.0)

    out = mish(x)
    jax.block_until_ready(out)

    ref = mish_reference(x)
    assert out.shape == x.shape and out.dtype == x.dtype
    assert jnp.allclose(out, ref, atol=1e-5, rtol=1e-5), "mismatch vs reference"

    # Secondary test: odd size exercises the bulk+tail fallback path.
    x2 = jax.random.normal(jax.random.PRNGKey(1), (3, 5, 13), dtype=jnp.float32)
    out2 = mish(x2)
    jax.block_until_ready(out2)
    assert jnp.allclose(out2, mish_reference(x2), atol=1e-5, rtol=1e-5)

    print("KERNEL_OK")
</pallas_src>

<mosaic_0001>
module attributes {stable_mosaic.version = 11 : i64} {
  func.func @_mish_kernel(%arg0: i32, %arg1: memref<1x2048xf32, #tpu.memory_space<vmem>>, %arg2: memref<1x2048xf32, #tpu.memory_space<vmem>>) attributes {dimension_semantics = [#tpu.dimension_semantics<parallel>], iteration_bounds = array<i64: 1>, scalar_prefetch = 0 : i64, scratch_operands = 0 : i64, tpu.core_type = #tpu.core_type<tc>, window_params = [{transform_indices = @transform_0, window_bounds = array<i64: 1, 2048>}, {transform_indices = @transform_1, window_bounds = array<i64: 1, 2048>}]} {
    %c0 = arith.constant 0 : index
    %c0_0 = arith.constant 0 : index
    %0 = vector.load %arg1[%c0, %c0_0] : memref<1x2048xf32, #tpu.memory_space<vmem>>, vector<1x2048xf32>
    %cst = arith.constant 2.000000e+01 : f32
    %1 = vector.broadcast %cst : f32 to vector<1x2048xf32>
    %2 = arith.minimumf %0, %1 : vector<1x2048xf32>
    %3 = math.exp %2 : vector<1x2048xf32>
    %cst_1 = arith.constant 2.000000e+00 : f32
    %4 = vector.broadcast %cst_1 : f32 to vector<1x2048xf32>
    %5 = arith.addf %3, %4 : vector<1x2048xf32>
    %6 = arith.mulf %3, %5 : vector<1x2048xf32>
    %cst_2 = arith.constant 2.000000e+00 : f32
    %7 = vector.broadcast %cst_2 : f32 to vector<1x2048xf32>
    %8 = arith.addf %6, %7 : vector<1x2048xf32>
    %9 = arith.divf %6, %8 : vector<1x2048xf32>
    %10 = arith.mulf %0, %9 : vector<1x2048xf32>
    %cst_3 = arith.constant 2.000000e+01 : f32
    %11 = vector.broadcast %cst_3 : f32 to vector<1x2048xf32>
    %12 = arith.cmpf ogt, %0, %11 : vector<1x2048xf32>
    %13 = arith.select %12, %0, %10 : vector<1x2048xi1>, vector<1x2048xf32>
    %c0_4 = arith.constant 0 : index
    %c0_5 = arith.constant 0 : index
    %14 = vector.load %arg2[%c0_4, %c0_5] : memref<1x2048xf32, #tpu.memory_space<vmem>>, vector<1x2048xf32>
    tpu.vector_store %arg2[%c0_4, %c0_5], %13 {strides = array<i32>} : memref<1x2048xf32, #tpu.memory_space<vmem>>, vector<1x2048xf32>,
    return
  }
  func.func @transform_0(%arg0: i32) -> (i32, i32) {
    %c0_i32 = arith.constant 0 : i32
    %c0_i32_0 = arith.constant 0 : i32
    return %arg0, %c0_i32 : i32, i32
  }
  func.func @transform_1(%arg0: i32) -> (i32, i32) {
    %c0_i32 = arith.constant 0 : i32
    %c0_i32_0 = arith.constant 0 : i32
    return %arg0, %c0_i32 : i32, i32
  }
}

</mosaic_0001>

<llo_original>
// kernel: tpu_custom_call.1
$region0: #{tpu_custom_call.1}
  #allocation0 [shape = 'u32[]', space=smem, size = 0x4, offset = 0x4, fixed_abs, tag = 'smem constant byte address 0x4 - core index']
  #allocation1 [shape = 'u32[72,128]{1,0:T(1,128)}', space=vmem, size = 0x9000, scoped, tag = 'internal scratch']
  %s0 = inlined_call_operand.hbm [shape: f32[1,2048], index: 0, kind: input, shape index: {}]
  %s1 = inlined_call_operand.hbm [shape: f32[1,2048], index: 1, kind: output, shape index: {}]
  %s2 = sld [smem:[#allocation0]]
  $region18: #{tpu_custom_call.1} parent=0
    _
  %s4 = ssub.s32 1, %s2
  %s5 = scalar_select 0, %s4, %s2
  $region1: #{tpu_custom_call.1} parent=0
    #allocation2 [shape = 'u8[8192]{0}', space=vmem, size = 0x2000, scoped, tag = 'input window, operand 0, single buffered']
    #allocation3 [shape = 's32[1]{0}', space=sflag, size = 0x4, scoped, tag = 'scoped memory for tpu_custom_call.1']
    #allocation4 [shape = 's32[1]{0}', space=sflag, size = 0x4, scoped, tag = 'scoped memory for tpu_custom_call.1']
    #allocation5 [shape = 'u8[8192]{0}', space=vmem, size = 0x2000, scoped, tag = 'output window, operand 0, single buffered']
    %6 = vsyncpa [#allocation3], 0
    %7 = vsyncpa [#allocation4], 0
    // Predicated region
    $region2: #{tpu_custom_call.1} parent=1 // pred_check
      _
    $region3: #{tpu_custom_call.1} parent=1 // pred_check_branch
      %9 = sbr.rel (0) target = $region5
    $region4: #{tpu_custom_call.1} parent=1 // pred_region
      %11 = vsyncadd [#allocation3], 0
      %s13 = sshll.u32 %s0, 4
      %s14 = int_to_ptr.hbm [resolvable:$true] %s13
      %s15 = sshll.u32 [#allocation2], 4
      %s16 = int_to_ptr.vmem [resolvable:$true] %s15
      %18 = dma.hbm_to_vmem [thread:$0]  %s14, 256, %s16, [#allocation3]
    $region5: #{tpu_custom_call.1} parent=1 // pred_fallthru
      _
    // Predicated region
    $region6: #{tpu_custom_call.1} parent=1 // pred_check
      _
    $region7: #{tpu_custom_call.1} parent=1 // pred_check_branch
      %20 = sbr.rel (0) target = $region9
    $region8: #{tpu_custom_call.1} parent=1 // pred_region
      %22 = dma.done [#allocation3], 256
    $region9: #{tpu_custom_call.1} parent=1 // pred_fallthru
      _
    %v23 = vld [vmem:[#allocation2] sm:$0xff]
    %v24 = vld [vmem:[#allocation2 + $0x8] sm:$0xff]
    %v25 = vmin.f32 %v23, 20.0
    %v26 = vmin.f32 %v24, 20.0
    %v27 = vmul.f32 %v25, 1.442695
    %v28 = vpow.pop %v27
    %v29 = vmul.f32 %v26, 1.442695
    %v30 = vpow.pop %v29
    %v31 = vadd.f32 %v28, 2.0
    %v32 = vadd.f32 %v30, 2.0
    %v33 = vmul.f32 %v28, %v31
    %v34 = vmul.f32 %v30, %v32
    %v35 = vadd.f32 %v33, 2.0
    %v36 = vadd.f32 %v34, 2.0
    %v37 = vrcp.pop %v35
    %v38 = vmul.f32 %v35, %v37
    %v39 = vsub.f32 1.0, %v38
    %v40 = vmul.f32 %v37, %v39
    %v41 = vadd.f32 %v37, %v40
    %vm42 = vweird.f32 %v35
    %vm43 = vweird.f32 %v37
    %vm44 = vmor %vm42, %vm43
    %v45 = vsel %vm44, %v37, %v41
    %v46 = vand.u32 2147483647, %v35
    %vm47 = vcmp.eq.f32.partialorder %v46, 8.507059e+37
    %v48 = vand.u32 %v35, 2147483648
    %v49 = vor.u32 1.1754944e-38, %v48
    %v50 = vsel %vm47, %v49, %v45
    %v51 = vmul.f32 %v33, %v50
    %v52 = vrcp.pop %v36
    %v53 = vmul.f32 %v36, %v52
    %v54 = vsub.f32 1.0, %v53
    %v55 = vmul.f32 %v52, %v54
    %v56 = vadd.f32 %v52, %v55
    %vm57 = vweird.f32 %v36
    %vm58 = vweird.f32 %v52
    %vm59 = vmor %vm57, %vm58
    %v60 = vsel %vm59, %v52, %v56
    %v61 = vand.u32 2147483647, %v36
    %vm62 = vcmp.eq.f32.partialorder %v61, 8.507059e+37
    %v63 = vand.u32 %v36, 2147483648
    %v64 = vor.u32 1.1754944e-38, %v63
    %v65 = vsel %vm62, %v64, %v60
    %v66 = vmul.f32 %v34, %v65
    %v67 = vmul.f32 %v23, %v51
    %v68 = vmul.f32 %v24, %v66
    %vm69 = vcmp.gt.f32.partialorder %v23, 20.0
    %vm70 = vcmp.gt.f32.partialorder %v24, 20.0
    %v71 = vsel %vm69, %v23, %v67
    %v72 = vsel %vm70, %v24, %v68
    %73 = vst [vmem:[#allocation5] sm:$0xff] %v71
    %74 = vst [vmem:[#allocation5 + $0x8] sm:$0xff] %v72
    // Predicated region
    $region10: #{tpu_custom_call.1} parent=1 // pred_check
      _
    $region11: #{tpu_custom_call.1} parent=1 // pred_check_branch
      %76 = sbr.rel (0) target = $region13
    $region12: #{tpu_custom_call.1} parent=1 // pred_region
      %78 = vsyncadd [#allocation4], 0
      %s80 = sshll.u32 [#allocation5], 4
      %s81 = int_to_ptr.vmem [resolvable:$true] %s80
      %s82 = sshll.u32 %s1, 4
      %s83 = int_to_ptr.hbm [resolvable:$true] %s82
      %85 = dma.vmem_to_hbm [thread:$0]  %s81, 256, %s83, [#allocation4]
    $region13: #{tpu_custom_call.1} parent=1 // pred_fallthru
      _
    // Predicated region
    $region14: #{tpu_custom_call.1} parent=1 // pred_check
      _
    $region15: #{tpu_custom_call.1} parent=1 // pred_check_branch
      %87 = sbr.rel (0) target = $region17
    $region16: #{tpu_custom_call.1} parent=1 // pred_region
      %89 = dma.done [#allocation4], 256
    $region17: #{tpu_custom_call.1} parent=1 // pred_fallthru
      _
    %90 = vsyncpa [#allocation3], 1
    %91 = vsyncpa [#allocation4], 1

</llo_original>
